<compile_context>
chip_gen: v6e
topology: v6e:2x2x1
jax: 0.10.0
libtpu: 0.0.40
codegen_flags: <defaults>
</compile_context>

<pallas_src>
import functools

import jax
import jax.numpy as jnp
from jax.experimental import pallas as pl
from jax.experimental.pallas import tpu as pltpu

K_SIZE = 7
PAD = (K_SIZE - 1) // 2
_ALIGN = 8                      # sublane-aligned write offset for the padded scratch


def _channel_attention_kernel(x_ref, w_ref, o_ref, sum_acc, max_acc, pad_ref,
                              *, inv_hw, tail_cols):
    # x_ref:   (1, C, t_hw) VMEM  -- one batch element, one spatial tile (native dtype)
    # w_ref:   (7,)         SMEM  -- raw conv taps (f32 scalars)
    # o_ref:   (1, C, 1)    VMEM  -- per-batch output (written on last tile)
    # sum_acc: (C, 1) f32 scratch -- running spatial sum
    # max_acc: (C, 1) f32 scratch -- running spatial max
    # pad_ref: (C + 2*_ALIGN, 1) f32 scratch -- zero-padded pooled vector (finalize only)
    h = pl.program_id(1)
    last = pl.num_programs(1) - 1

    @pl.when(h == 0)
    def _init():
        sum_acc[...] = jnp.zeros_like(sum_acc)
        max_acc[...] = jnp.full_like(max_acc, -jnp.inf)

    def _accumulate(valid_cols):
        xf = x_ref[0].astype(jnp.float32)          # (C, t_hw); no-op cast for f32 input
        if valid_cols is None:
            xs = xf
            xm = xf
        else:
            col = jax.lax.broadcasted_iota(jnp.int32, xf.shape, 1)
            valid = col < valid_cols
            xs = jnp.where(valid, xf, 0.0)
            xm = jnp.where(valid, xf, -jnp.inf)
        sum_acc[...] += jnp.sum(xs, axis=1, keepdims=True)                # (C, 1)
        max_acc[...] = jnp.maximum(max_acc[...],
                                   jnp.max(xm, axis=1, keepdims=True))    # (C, 1)

    if tail_cols == 0:
        _accumulate(None)                          # every tile is full-width
    else:
        @pl.when(h < last)
        def _interior():                           # hot path: no mask ops at all
            _accumulate(None)

        @pl.when(h == last)
        def _tail():                               # only the tail tile is masked
            _accumulate(tail_cols)

    @pl.when(h == last)
    def _finalize():
        c = sum_acc.shape[0]
        # Conv is linear with no bias, so conv(avg) + conv(max) == conv(avg + max).
        pooled = sum_acc[...] * inv_hw + max_acc[...]          # (C, 1) f32
        # Zero-padded channel vector: pooled[j] sits at row (_ALIGN + j).
        pad_ref[...] = jnp.zeros_like(pad_ref)
        pad_ref[pl.ds(_ALIGN, c), :] = pooled
        # "same" 7-tap cross-correlation, matching PyTorch Conv1d:
        #   conv[i] = sum_k w[k] * pooled[i + k - PAD]   (zero padding at borders)
        conv = w_ref[0] * pad_ref[pl.ds(_ALIGN - PAD, c), :]
        for k in range(1, K_SIZE):
            conv = conv + w_ref[k] * pad_ref[pl.ds(_ALIGN - PAD + k, c), :]
        o_ref[0] = jax.nn.sigmoid(conv).astype(o_ref.dtype)


def _vmem_capacity_bytes():
    try:
        return int(pltpu.get_tpu_info().vmem_capacity_bytes)
    except Exception:
        return 64 * 1024 * 1024        # conservative fallback: v7x per-TensorCore VMEM


def _pick_tile(c, hw, itemsize, max_tile_cols):
    # Per x-block byte budget: ~1/8 of VMEM capacity, capped at 16 MiB
    # (=> 16 MiB blocks on 128-MiB v5e/v6e, 8 MiB blocks on 64-MiB v7x), so the
    # 2x double-buffered x stream plus scratch fits every generation.
    block_budget = max(1 << 20, min(_vmem_capacity_bytes() // 8, 16 << 20))
    budget_cols = max(128, block_budget // (c * itemsize))
    if max_tile_cols is not None:
        budget_cols = max(128, min(budget_cols, max_tile_cols))
    if hw <= budget_cols:
        return hw                      # single full-extent tile (block == full dim)
    return max(128, (budget_cols // 128) * 128)


def channel_attention(x_nchw, w, *, max_tile_cols=None):
    """x_nchw: (N, C, H, W); w: (7,) Conv1d taps. Returns (N, C, 1, 1) in x's dtype."""
    N, C, H, W = x_nchw.shape
    HW = H * W
    # Contiguous reshape only -- no dtype cast, no HBM transpose/copy pass.
    x = x_nchw.reshape(N, C, HW)
    w = jnp.asarray(w, jnp.float32).reshape(K_SIZE)

    itemsize = jnp.dtype(x.dtype).itemsize
    t_hw = _pick_tile(C, HW, itemsize, max_tile_cols)
    num_hw = pl.cdiv(HW, t_hw)
    tail_cols = HW % t_hw              # 0 => every tile full, no masking anywhere

    block_bytes = C * t_hw * itemsize
    vmem_limit = int(min(_vmem_capacity_bytes() * 3 // 4,
                         max(2 * block_bytes + (8 << 20), 32 << 20)))

    kernel = functools.partial(_channel_attention_kernel,
                               inv_hw=1.0 / HW, tail_cols=tail_cols)

    cost = pl.CostEstimate(
        flops=2 * N * C * HW + N * C * (2 * K_SIZE + 2),
        transcendentals=N * C,
        bytes_accessed=N * C * HW * itemsize + K_SIZE * 4 + N * C * itemsize,
    )

    out = pl.pallas_call(
        kernel,
        out_shape=jax.ShapeDtypeStruct((N, C, 1), x.dtype),
        grid_spec=pltpu.PrefetchScalarGridSpec(
            num_scalar_prefetch=0,
            grid=(N, num_hw),
            in_specs=[
                pl.BlockSpec((1, C, t_hw), lambda n, h: (n, 0, h)),
                pl.BlockSpec(memory_space=pltpu.MemorySpace.SMEM),
            ],
            out_specs=pl.BlockSpec((1, C, 1), lambda n, h: (n, 0, 0)),
            scratch_shapes=[
                pltpu.VMEM((C, 1), jnp.float32),               # running sum
                pltpu.VMEM((C, 1), jnp.float32),               # running max
                pltpu.VMEM((C + 2 * _ALIGN, 1), jnp.float32),  # padded pooled vector
            ],
        ),
        compiler_params=pltpu.CompilerParams(
            dimension_semantics=("parallel", "arbitrary"),
            vmem_limit_bytes=vmem_limit),
        cost_estimate=cost,
    )(x, w)

    # (N, C, 1) -> (N, C, 1, 1): pure reshape, no data movement.
    return out.reshape(N, C, 1, 1)


if __name__ == "__main__":
    key = jax.random.PRNGKey(0)
    kx, kw = jax.random.split(key)

    N, C, H, W = 2, 8, 18, 18
    x = jax.random.normal(kx, (N, C, H, W), dtype=jnp.float32)

    # Conv1d(1, 1, 7, bias=False) PyTorch default init: U(-1/sqrt(7), 1/sqrt(7)).
    bound = 1.0 / (K_SIZE ** 0.5)
    w = jax.random.uniform(kw, (K_SIZE,), minval=-bound, maxval=bound,
                           dtype=jnp.float32)

    # max_tile_cols=128 so the demo exercises the tiled reduction + masked tail tile.
    out = jax.block_until_ready(channel_attention(x, w, max_tile_cols=128))

    # Pure-JAX reference.
    avg = x.mean(axis=(2, 3))                      # (N, C)
    mx = x.max(axis=(2, 3))                        # (N, C)

    def conv1d_same(v):
        vp = jnp.pad(v, ((0, 0), (PAD, PAD)))
        return sum(w[k] * vp[:, k:k + C] for k in range(K_SIZE))

    ref = jax.nn.sigmoid(conv1d_same(avg) + conv1d_same(mx)).reshape(N, C, 1, 1)
    assert out.shape == (N, C, 1, 1)
    assert jnp.allclose(out, ref, atol=1e-5, rtol=1e-5), "mismatch vs reference"

    print("KERNEL_OK")
</pallas_src>

<mosaic_0001>
module attributes {stable_mosaic.version = 11 : i64} {
  func.func @_channel_attention_kernel(%arg0: i32, %arg1: i32, %arg2: memref<1x8x128xf32, #tpu.memory_space<vmem>>, %arg3: memref<7xf32, #tpu.memory_space<smem>>, %arg4: memref<1x8x1xf32, #tpu.memory_space<vmem>>, %arg5: memref<8x1xf32, #tpu.memory_space<vmem>>, %arg6: memref<8x1xf32, #tpu.memory_space<vmem>>, %arg7: memref<24x1xf32, #tpu.memory_space<vmem>>) attributes {dimension_semantics = [#tpu.dimension_semantics<parallel>, #tpu.dimension_semantics<arbitrary>], iteration_bounds = array<i64: 2, 3>, scalar_prefetch = 0 : i64, scratch_operands = 3 : i64, tpu.core_type = #tpu.core_type<tc>, window_params = [{transform_indices = @transform_0, window_bounds = array<i64: 1, 8, 128>}, {transform_indices = @transform_1, window_bounds = array<i64: 7>}, {transform_indices = @transform_2, window_bounds = array<i64: 1, 8, 1>}]} {
    %c0_i32 = arith.constant 0 : i32
    %0 = arith.cmpi eq, %arg1, %c0_i32 : i32
    %1 = arith.extui %0 : i1 to i32
    %c0_i32_0 = arith.constant 0 : i32
    %2 = arith.cmpi ne, %1, %c0_i32_0 : i32
    scf.if %2 {
      %cst = arith.constant 0.000000e+00 : f32
      %12 = vector.broadcast %cst : f32 to vector<8x1xf32>
      %c0 = arith.constant 0 : index
      %c0_6 = arith.constant 0 : index
      %13 = vector.load %arg5[%c0, %c0_6] : memref<8x1xf32, #tpu.memory_space<vmem>>, vector<8x1xf32>
      tpu.vector_store %arg5[%c0, %c0_6], %12 {strides = array<i32>} : memref<8x1xf32, #tpu.memory_space<vmem>>, vector<8x1xf32>,
      %cst_7 = arith.constant 0xFF800000 : f32
      %14 = vector.broadcast %cst_7 : f32 to vector<8x1xf32>
      %c0_8 = arith.constant 0 : index
      %c0_9 = arith.constant 0 : index
      %15 = vector.load %arg6[%c0_8, %c0_9] : memref<8x1xf32, #tpu.memory_space<vmem>>, vector<8x1xf32>
      tpu.vector_store %arg6[%c0_8, %c0_9], %14 {strides = array<i32>} : memref<8x1xf32, #tpu.memory_space<vmem>>, vector<8x1xf32>,
    } else {
    }
    %c2_i32 = arith.constant 2 : i32
    %3 = arith.cmpi slt, %arg1, %c2_i32 : i32
    %4 = arith.extui %3 : i1 to i32
    %c0_i32_1 = arith.constant 0 : i32
    %5 = arith.cmpi ne, %4, %c0_i32_1 : i32
    scf.if %5 {
      %c0 = arith.constant 0 : index
      %c0_6 = arith.constant 0 : index
      %c0_7 = arith.constant 0 : index
      %12 = vector.load %arg2[%c0, %c0_6, %c0_7] : memref<1x8x128xf32, #tpu.memory_space<vmem>>, vector<1x8x128xf32>
      %13 = vector.shape_cast %12 : vector<1x8x128xf32> to vector<8x128xf32>
      %c0_8 = arith.constant 0 : index
      %c0_9 = arith.constant 0 : index
      %14 = vector.load %arg5[%c0_8, %c0_9] : memref<8x1xf32, #tpu.memory_space<vmem>>, vector<8x1xf32>
      %cst = arith.constant dense<0.000000e+00> : vector<8xf32>
      %15 = vector.multi_reduction <add>, %13, %cst [1] : vector<8x128xf32> to vector<8xf32>
      %16 = vector.shape_cast %15 : vector<8xf32> to vector<8x1xf32>
      %17 = arith.addf %14, %16 : vector<8x1xf32>
      %c0_10 = arith.constant 0 : index
      %c0_11 = arith.constant 0 : index
      %18 = vector.load %arg5[%c0_10, %c0_11] : memref<8x1xf32, #tpu.memory_space<vmem>>, vector<8x1xf32>
      tpu.vector_store %arg5[%c0_10, %c0_11], %17 {strides = array<i32>} : memref<8x1xf32, #tpu.memory_space<vmem>>, vector<8x1xf32>,
      %c0_12 = arith.constant 0 : index
      %c0_13 = arith.constant 0 : index
      %19 = vector.load %arg6[%c0_12, %c0_13] : memref<8x1xf32, #tpu.memory_space<vmem>>, vector<8x1xf32>
      %cst_14 = arith.constant dense<0xFF800000> : vector<8xf32>
      %20 = vector.multi_reduction <maximumf>, %13, %cst_14 [1] : vector<8x128xf32> to vector<8xf32>
      %21 = vector.shape_cast %20 : vector<8xf32> to vector<8x1xf32>
      %22 = arith.maximumf %19, %21 : vector<8x1xf32>
      %c0_15 = arith.constant 0 : index
      %c0_16 = arith.constant 0 : index
      %23 = vector.load %arg6[%c0_15, %c0_16] : memref<8x1xf32, #tpu.memory_space<vmem>>, vector<8x1xf32>
      tpu.vector_store %arg6[%c0_15, %c0_16], %22 {strides = array<i32>} : memref<8x1xf32, #tpu.memory_space<vmem>>, vector<8x1xf32>,
    } else {
    }
    %c2_i32_2 = arith.constant 2 : i32
    %6 = arith.cmpi eq, %arg1, %c2_i32_2 : i32
    %7 = arith.extui %6 : i1 to i32
    %c0_i32_3 = arith.constant 0 : i32
    %8 = arith.cmpi ne, %7, %c0_i32_3 : i32
    scf.if %8 {
      %c0 = arith.constant 0 : index
      %c0_6 = arith.constant 0 : index
      %c0_7 = arith.constant 0 : index
      %12 = vector.load %arg2[%c0, %c0_6, %c0_7] : memref<1x8x128xf32, #tpu.memory_space<vmem>>, vector<1x8x128xf32>
      %13 = vector.shape_cast %12 : vector<1x8x128xf32> to vector<8x128xf32>
      %14 = tpu.iota {dimensions = array<i32: 1>} : vector<8x128xi32>
      %c68_i32 = arith.constant 68 : i32
      %15 = vector.broadcast %c68_i32 : i32 to vector<8x128xi32>
      %16 = arith.cmpi slt, %14, %15 : vector<8x128xi32>
      %cst = arith.constant 0.000000e+00 : f32
      %17 = vector.broadcast %cst : f32 to vector<8x128xf32>
      %18 = arith.select %16, %13, %17 : vector<8x128xi1>, vector<8x128xf32>
      %cst_8 = arith.constant 0xFF800000 : f32
      %19 = vector.broadcast %cst_8 : f32 to vector<8x128xf32>
      %20 = arith.select %16, %13, %19 : vector<8x128xi1>, vector<8x128xf32>
      %c0_9 = arith.constant 0 : index
      %c0_10 = arith.constant 0 : index
      %21 = vector.load %arg5[%c0_9, %c0_10] : memref<8x1xf32, #tpu.memory_space<vmem>>, vector<8x1xf32>
      %cst_11 = arith.constant dense<0.000000e+00> : vector<8xf32>
      %22 = vector.multi_reduction <add>, %18, %cst_11 [1] : vector<8x128xf32> to vector<8xf32>
      %23 = vector.shape_cast %22 : vector<8xf32> to vector<8x1xf32>
      %24 = arith.addf %21, %23 : vector<8x1xf32>
      %c0_12 = arith.constant 0 : index
      %c0_13 = arith.constant 0 : index
      %25 = vector.load %arg5[%c0_12, %c0_13] : memref<8x1xf32, #tpu.memory_space<vmem>>, vector<8x1xf32>
      tpu.vector_store %arg5[%c0_12, %c0_13], %24 {strides = array<i32>} : memref<8x1xf32, #tpu.memory_space<vmem>>, vector<8x1xf32>,
      %c0_14 = arith.constant 0 : index
      %c0_15 = arith.constant 0 : index
      %26 = vector.load %arg6[%c0_14, %c0_15] : memref<8x1xf32, #tpu.memory_space<vmem>>, vector<8x1xf32>
      %cst_16 = arith.constant dense<0xFF800000> : vector<8xf32>
      %27 = vector.multi_reduction <maximumf>, %20, %cst_16 [1] : vector<8x128xf32> to vector<8xf32>
      %28 = vector.shape_cast %27 : vector<8xf32> to vector<8x1xf32>
      %29 = arith.maximumf %26, %28 : vector<8x1xf32>
      %c0_17 = arith.constant 0 : index
      %c0_18 = arith.constant 0 : index
      %30 = vector.load %arg6[%c0_17, %c0_18] : memref<8x1xf32, #tpu.memory_space<vmem>>, vector<8x1xf32>
      tpu.vector_store %arg6[%c0_17, %c0_18], %29 {strides = array<i32>} : memref<8x1xf32, #tpu.memory_space<vmem>>, vector<8x1xf32>,
    } else {
    }
    %c2_i32_4 = arith.constant 2 : i32
    %9 = arith.cmpi eq, %arg1, %c2_i32_4 : i32
    %10 = arith.extui %9 : i1 to i32
    %c0_i32_5 = arith.constant 0 : i32
    %11 = arith.cmpi ne, %10, %c0_i32_5 : i32
    scf.if %11 {
      %c0 = arith.constant 0 : index
      %c0_6 = arith.constant 0 : index
      %12 = vector.load %arg5[%c0, %c0_6] : memref<8x1xf32, #tpu.memory_space<vmem>>, vector<8x1xf32>
      %cst = arith.constant 0.00308641978 : f32
      %13 = vector.broadcast %cst : f32 to vector<8x1xf32>
      %14 = arith.mulf %12, %13 : vector<8x1xf32>
      %c0_7 = arith.constant 0 : index
      %c0_8 = arith.constant 0 : index
      %15 = vector.load %arg6[%c0_7, %c0_8] : memref<8x1xf32, #tpu.memory_space<vmem>>, vector<8x1xf32>
      %16 = arith.addf %14, %15 : vector<8x1xf32>
      %cst_9 = arith.constant 0.000000e+00 : f32
      %17 = vector.broadcast %cst_9 : f32 to vector<24x1xf32>
      %c0_10 = arith.constant 0 : index
      %c0_11 = arith.constant 0 : index
      %18 = vector.load %arg7[%c0_10, %c0_11] : memref<24x1xf32, #tpu.memory_space<vmem>>, vector<24x1xf32>
      tpu.vector_store %arg7[%c0_10, %c0_11], %17 {strides = array<i32>} : memref<24x1xf32, #tpu.memory_space<vmem>>, vector<24x1xf32>,
      %c8 = arith.constant 8 : index
      %c0_12 = arith.constant 0 : index
      %19 = vector.load %arg7[%c8, %c0_12] : memref<24x1xf32, #tpu.memory_space<vmem>>, vector<8x1xf32>
      tpu.vector_store %arg7[%c8, %c0_12], %16 {strides = array<i32>} : memref<24x1xf32, #tpu.memory_space<vmem>>, vector<8x1xf32>,
      %c0_13 = arith.constant 0 : index
      %20 = memref.load %arg3[%c0_13] : memref<7xf32, #tpu.memory_space<smem>>
      %c5 = arith.constant 5 : index
      %c0_14 = arith.constant 0 : index
      %21 = vector.load %arg7[%c5, %c0_14] : memref<24x1xf32, #tpu.memory_space<vmem>>, vector<8x1xf32>
      %22 = vector.broadcast %20 : f32 to vector<8x1xf32>
      %23 = arith.mulf %22, %21 : vector<8x1xf32>
      %c1 = arith.constant 1 : index
      %24 = memref.load %arg3[%c1] : memref<7xf32, #tpu.memory_space<smem>>
      %c6 = arith.constant 6 : index
      %c0_15 = arith.constant 0 : index
      %25 = vector.load %arg7[%c6, %c0_15] : memref<24x1xf32, #tpu.memory_space<vmem>>, vector<8x1xf32>
      %26 = vector.broadcast %24 : f32 to vector<8x1xf32>
      %27 = arith.mulf %26, %25 : vector<8x1xf32>
      %28 = arith.addf %23, %27 : vector<8x1xf32>
      %c2 = arith.constant 2 : index
      %29 = memref.load %arg3[%c2] : memref<7xf32, #tpu.memory_space<smem>>
      %c7 = arith.constant 7 : index
      %c0_16 = arith.constant 0 : index
      %30 = vector.load %arg7[%c7, %c0_16] : memref<24x1xf32, #tpu.memory_space<vmem>>, vector<8x1xf32>
      %31 = vector.broadcast %29 : f32 to vector<8x1xf32>
      %32 = arith.mulf %31, %30 : vector<8x1xf32>
      %33 = arith.addf %28, %32 : vector<8x1xf32>
      %c3 = arith.constant 3 : index
      %34 = memref.load %arg3[%c3] : memref<7xf32, #tpu.memory_space<smem>>
      %c8_17 = arith.constant 8 : index
      %c0_18 = arith.constant 0 : index
      %35 = vector.load %arg7[%c8_17, %c0_18] : memref<24x1xf32, #tpu.memory_space<vmem>>, vector<8x1xf32>
      %36 = vector.broadcast %34 : f32 to vector<8x1xf32>
      %37 = arith.mulf %36, %35 : vector<8x1xf32>
      %38 = arith.addf %33, %37 : vector<8x1xf32>
      %c4 = arith.constant 4 : index
      %39 = memref.load %arg3[%c4] : memref<7xf32, #tpu.memory_space<smem>>
      %c9 = arith.constant 9 : index
      %c0_19 = arith.constant 0 : index
      %40 = vector.load %arg7[%c9, %c0_19] : memref<24x1xf32, #tpu.memory_space<vmem>>, vector<8x1xf32>
      %41 = vector.broadcast %39 : f32 to vector<8x1xf32>
      %42 = arith.mulf %41, %40 : vector<8x1xf32>
      %43 = arith.addf %38, %42 : vector<8x1xf32>
      %c5_20 = arith.constant 5 : index
      %44 = memref.load %arg3[%c5_20] : memref<7xf32, #tpu.memory_space<smem>>
      %c10 = arith.constant 10 : index
      %c0_21 = arith.constant 0 : index
      %45 = vector.load %arg7[%c10, %c0_21] : memref<24x1xf32, #tpu.memory_space<vmem>>, vector<8x1xf32>
      %46 = vector.broadcast %44 : f32 to vector<8x1xf32>
      %47 = arith.mulf %46, %45 : vector<8x1xf32>
      %48 = arith.addf %43, %47 : vector<8x1xf32>
      %c6_22 = arith.constant 6 : index
      %49 = memref.load %arg3[%c6_22] : memref<7xf32, #tpu.memory_space<smem>>
      %c11 = arith.constant 11 : index
      %c0_23 = arith.constant 0 : index
      %50 = vector.load %arg7[%c11, %c0_23] : memref<24x1xf32, #tpu.memory_space<vmem>>, vector<8x1xf32>
      %51 = vector.broadcast %49 : f32 to vector<8x1xf32>
      %52 = arith.mulf %51, %50 : vector<8x1xf32>
      %53 = arith.addf %48, %52 : vector<8x1xf32>
      %54 = arith.negf %53 : vector<8x1xf32>
      %55 = math.exp %54 : vector<8x1xf32>
      %cst_24 = arith.constant 1.000000e+00 : f32
      %56 = vector.broadcast %cst_24 : f32 to vector<8x1xf32>
      %57 = arith.addf %56, %55 : vector<8x1xf32>
      %58 = arith.divf %56, %57 : vector<8x1xf32>
      %c0_25 = arith.constant 0 : index
      %c0_26 = arith.constant 0 : index
      %c0_27 = arith.constant 0 : index
      %59 = vector.load %arg4[%c0_25, %c0_26, %c0_27] : memref<1x8x1xf32, #tpu.memory_space<vmem>>, vector<1x8x1xf32>
      %60 = vector.shape_cast %59 : vector<1x8x1xf32> to vector<8x1xf32>
      %61 = vector.shape_cast %58 : vector<8x1xf32> to vector<1x8x1xf32>
      tpu.vector_store %arg4[%c0_25, %c0_26, %c0_27], %61 {strides = array<i32>} : memref<1x8x1xf32, #tpu.memory_space<vmem>>, vector<1x8x1xf32>,
    } else {
    }
    return
  }
  func.func @transform_0(%arg0: i32, %arg1: i32) -> (i32, i32, i32) {
    %c0_i32 = arith.constant 0 : i32
    %c0_i32_0 = arith.constant 0 : i32
    return %arg0, %c0_i32, %arg1 : i32, i32, i32
  }
  func.func @transform_1(%arg0: i32, %arg1: i32) -> i32 {
    %c0_i32 = arith.constant 0 : i32
    %c0_i32_0 = arith.constant 0 : i32
    return %c0_i32 : i32
  }
  func.func @transform_2(%arg0: i32, %arg1: i32) -> (i32, i32, i32) {
    %c0_i32 = arith.constant 0 : i32
    %c0_i32_0 = arith.constant 0 : i32
    %c0_i32_1 = arith.constant 0 : i32
    return %arg0, %c0_i32, %c0_i32_0 : i32, i32, i32
  }
}

</mosaic_0001>

<llo_original>
// kernel: tpu_custom_call.1
$region0: #{tpu_custom_call.1}
  #allocation0 [shape = 'u32[]', space=smem, size = 0x4, offset = 0x4, fixed_abs, tag = 'smem constant byte address 0x4 - core index']
  #allocation1 [shape = 'u32[144,128]{1,0:T(1,128)}', space=vmem, size = 0x12000, scoped, tag = 'internal scratch']
  #allocation2 [shape = 'f32[8,1]{1,0:T(8,128)}', space=vmem, size = 0x1000, scoped, tag = 'scratch operand']
  #allocation3 [shape = 'f32[8,1]{1,0:T(8,128)}', space=vmem, size = 0x1000, scoped, tag = 'scratch operand']
  #allocation4 [shape = 'f32[24,1]{1,0:T(8,128)}', space=vmem, size = 0x3000, scoped, tag = 'scratch operand']
  %s0 = inlined_call_operand.hbm [shape: f32[2,8,324], index: 0, kind: input, shape index: {}]
  %s1 = inlined_call_operand.vmem [shape: f32[7], index: 1, kind: input, shape index: {}]
  %s2 = inlined_call_operand.vmem [shape: f32[2,8,1], index: 2, kind: output, shape index: {}]
  %s3 = sld [smem:[#allocation0]]
  $region61: #{tpu_custom_call.1} parent=0
    _
  %s5 = ssub.s32 1, %s3
  %s6 = scalar_select 0, %s5, %s3
  $region1: #{tpu_custom_call.1} parent=0
    #allocation5 [shape = 'u8[8192]{0}', space=vmem, size = 0x2000, scoped, tag = 'input window, operand 0']
    #allocation6 [shape = 's32[2]{0}', space=sflag, size = 0x8, scoped, tag = 'scoped memory for tpu_custom_call.1']
    #allocation7 [shape = 's32[2]{0}', space=sflag, size = 0x8, scoped, tag = 'scoped memory for tpu_custom_call.1']
    #allocation8 [shape = 'u8[512]{0}', space=smem, size = 0x200, scoped, tag = 'input window, operand 1, single buffered']
    %7 = vsyncpa [#allocation6], 0
    %s8 = scalar_lea.sflag [#allocation6], 1
    %9 = vsyncpa %s8, 0
    %10 = vsyncpa [#allocation7], 0
    loop: start=0, step=1, limit=8
    $region2: #{tpu_custom_call.1} parent=1 // loop_pre_header
      _
    $region3: #{tpu_custom_call.1} parent=1 // loop_header
      %s12 = sphi 0, %s16
      %p13 = scmp.ge.s32.totalorder %s12, 8
      %s19 = sphi 0, %s31
      %s20 = sphi 0, %s27
      %s21 = sphi 0, %s19
      %s22 = sphi 0, %s20
      %s23 = sphi 0, %s21
      %s24 = sphi 0, %s22
      %s36 = sphi 0, %s38
      %s39 = sphi 0, %s36
      %s40 = sphi 0, %s39
      %s56 = sphi 0, %s40
      %s60 = sphi 0, %s60
      %s62 = sphi 0, %s60
      %s63 = sphi 0, %s62
      %s77 = sphi 0, %s63
      %s83 = sphi 0, %s85
      %s86 = sphi 0, %s83
      %s87 = sphi 0, %s86
      %s103 = sphi 0, %s87
    $region4: #{tpu_custom_call.1} parent=1 // loop_header_branch
      %15 = sbr.rel (%p13) target = $region8
    $region5: #{tpu_custom_call.1} parent=1 // loop_body
      %s17 = ssub.s32 %s12, 1
      %s18 = ssub.s32 %s12, 2
      %s25 = sadd.s32 1, %s20
      %p26 = scmp.ge.s32.totalorder %s25, 3
      %s27 = scalar_select %p26, 0, %s25
      %s28 = sadd.s32 1, %s19
      %s29 = scalar_select %p26, %s28, %s19
      %p30 = scmp.ge.s32.totalorder %s29, 2
      %s31 = scalar_select %p30, 0, %s29
      %s32 = ssub.s32 %s19, %s31
      %s33 = ssub.s32 %s20, %s27
      %s34 = sor.u32 %s32, %s33
      %p35 = scmp.eq.s32.totalorder %s34, 0
      %s37 = sadd.s32 %s36, 1
      %s38 = scalar_select %p35, %s36, %s37
      %p41 = pneg %p35
      %p42 = scmp.eq.s32.totalorder %s12, 5
      %p43 = por %p41, %p42
      %p44 = scmp.ne.s32.totalorder %s36, %s39
      %p45 = scmp.eq.s32.totalorder %s12, 0
      %p46 = por %p44, %p45
      %p47 = scmp.ne.s32.totalorder %s36, %s39
      %p48 = scmp.eq.s32.totalorder %s17, 5
      %p49 = por %p47, %p48
      %p50 = scmp.ne.s32.totalorder %s39, %s40
      %p51 = scmp.eq.s32.totalorder %s17, 0
      %p52 = por %p50, %p51
      %p53 = scmp.ne.s32.totalorder %s39, %s40
      %p54 = scmp.eq.s32.totalorder %s18, 5
      %p55 = por %p53, %p54
      %p57 = scmp.ne.s32.totalorder %s40, %s56
      %p58 = scmp.eq.s32.totalorder %s18, 0
      %p59 = por %p57, %p58
      %s61 = sadd.s32 %s60, 1
      %p64 = scmp.eq.s32.totalorder %s12, 5
      %p65 = scmp.ne.s32.totalorder %s60, %s62
      %p66 = scmp.eq.s32.totalorder %s12, 0
      %p67 = por %p65, %p66
      %p68 = scmp.ne.s32.totalorder %s60, %s62
      %p69 = scmp.eq.s32.totalorder %s17, 5
      %p70 = por %p68, %p69
      %p71 = scmp.ne.s32.totalorder %s62, %s63
      %p72 = scmp.eq.s32.totalorder %s17, 0
      %p73 = por %p71, %p72
      %p74 = scmp.ne.s32.totalorder %s62, %s63
      %p75 = scmp.eq.s32.totalorder %s18, 5
      %p76 = por %p74, %p75
      %p78 = scmp.ne.s32.totalorder %s63, %s77
      %p79 = scmp.eq.s32.totalorder %s18, 0
      %p80 = por %p78, %p79
      %s81 = ssub.s32 %s19, %s31
      %p82 = scmp.eq.s32.totalorder %s81, 0
      %s84 = sadd.s32 %s83, 1
      %s85 = scalar_select %p82, %s83, %s84
      %p88 = pneg %p82
      %p89 = scmp.eq.s32.totalorder %s12, 5
      %p90 = por %p88, %p89
      %p91 = scmp.ne.s32.totalorder %s83, %s86
      %p92 = scmp.eq.s32.totalorder %s12, 0
      %p93 = por %p91, %p92
      %p94 = scmp.ne.s32.totalorder %s83, %s86
      %p95 = scmp.eq.s32.totalorder %s17, 5
      %p96 = por %p94, %p95
      %p97 = scmp.ne.s32.totalorder %s86, %s87
      %p98 = scmp.eq.s32.totalorder %s17, 0
      %p99 = por %p97, %p98
      %p100 = scmp.ne.s32.totalorder %s86, %s87
      %p101 = scmp.eq.s32.totalorder %s18, 5
      %p102 = por %p100, %p101
      %p104 = scmp.ne.s32.totalorder %s87, %s103
      %p105 = scmp.eq.s32.totalorder %s18, 0
      %p106 = por %p104, %p105
      %p107 = scmp.le.s32.totalorder 1, %s12
      %p108 = scmp.lt.s32.totalorder %s12, 7
      %p109 = pnand %p107, %p108
      %p110 = pneg %p109
      // Predicated region
      $region9: #{tpu_custom_call.1} parent=5 // pred_check
        _
      $region10: #{tpu_custom_call.1} parent=5 // pred_check_branch
        %112 = sbr.rel (%p109) target = $region12
      $region11: #{tpu_custom_call.1} parent=5 // pred_region
        %s113 = ssub.s32 %s12, 1
        // Predicated region
        $region13: #{tpu_custom_call.1} parent=11 // pred_check
          %p114 = pneg %p73
        $region14: #{tpu_custom_call.1} parent=11 // pred_check_branch
          %116 = sbr.rel (%p114) target = $region16
        $region15: #{tpu_custom_call.1} parent=11 // pred_region
          %s118 = ssub.s32 16, 16
          %119 = vsyncadd [#allocation7], %s118
          %s121 = sshll.u32 %s1, 4
          %s122 = int_to_ptr.vmem [resolvable:$true] %s121
          %124 = dma.vmem_to_smem %s122, 16, [#allocation8], [#allocation7]
        $region16: #{tpu_custom_call.1} parent=11 // pred_fallthru
          _
      $region12: #{tpu_custom_call.1} parent=5 // pred_fallthru
        _
      %p125 = scmp.lt.s32.totalorder %s12, 6
      // Predicated region
      $region17: #{tpu_custom_call.1} parent=5 // pred_check
        %p126 = pneg %p125
      $region18: #{tpu_custom_call.1} parent=5 // pred_check_branch
        %128 = sbr.rel (%p126) target = $region20
      $region19: #{tpu_custom_call.1} parent=5 // pred_region
        // Predicated region
        $region21: #{tpu_custom_call.1} parent=19 // pred_check
          %p129 = pneg %p46
        $region22: #{tpu_custom_call.1} parent=19 // pred_check_branch
          %131 = sbr.rel (%p129) target = $region24
        $region23: #{tpu_custom_call.1} parent=19 // pred_region
          %s132 = sand.u32 %s36, 1
          %s133 = scalar_lea.sflag [#allocation6], %s132
          %s134 = sand.u32 %s36, 1
          %s135 = smul.addr %s134, 8
          %s136 = scalar_lea.vmem [#allocation5], %s135
          %s138 = ssub.s32 128, 128
          %139 = vsyncadd %s133, %s138
          %s140 = smul.addr %s19, 3
          %s141 = sadd.s32 %s20, %s140
          %s142 = smul.addr %s141, 128
          %s143 = scalar_lea.hbm %s0, %s142
          %s145 = sshll.u32 %s136, 4
          %s146 = int_to_ptr.vmem [resolvable:$true] %s145
          %148 = dma.hbm_to_vmem [thread:$0]  %s143, 128, %s146, %s133
        $region24: #{tpu_custom_call.1} parent=19 // pred_fallthru
          _
      $region20: #{tpu_custom_call.1} parent=5 // pred_fallthru
        _
      %p149 = scmp.le.s32.totalorder 1, %s12
      %p150 = scmp.lt.s32.totalorder %s12, 7
      %p151 = pnand %p149, %p150
      %p152 = pneg %p151
      // Predicated region
      $region25: #{tpu_custom_call.1} parent=5 // pred_check
        _
      $region26: #{tpu_custom_call.1} parent=5 // pred_check_branch
        %154 = sbr.rel (%p151) target = $region28
      $region27: #{tpu_custom_call.1} parent=5 // pred_region
        %s155 = ssub.s32 %s12, 1
        %s156 = sand.u32 %s39, 1
        %s157 = scalar_lea.sflag [#allocation6], %s156
        %s158 = sand.u32 %s39, 1
        %s159 = smul.addr %s158, 8
        %s160 = scalar_lea.vmem [#allocation5], %s159
        // Predicated region
        $region29: #{tpu_custom_call.1} parent=27 // pred_check
          %p161 = pneg %p52
        $region30: #{tpu_custom_call.1} parent=27 // pred_check_branch
          %163 = sbr.rel (%p161) target = $region32
        $region31: #{tpu_custom_call.1} parent=27 // pred_region
          %164 = dma.done %s157, 128
        $region32: #{tpu_custom_call.1} parent=27 // pred_fallthru
          _
        // Predicated region
        $region33: #{tpu_custom_call.1} parent=27 // pred_check
          %p165 = pneg %p73
        $region34: #{tpu_custom_call.1} parent=27 // pred_check_branch
          %167 = sbr.rel (%p165) target = $region36
        $region35: #{tpu_custom_call.1} parent=27 // pred_region
          %168 = dma.done [#allocation7], 16
        $region36: #{tpu_custom_call.1} parent=27 // pred_fallthru
          _
        %169 = sfence
        %s170 = sand.u32 %s39, 1
        %s171 = scalar_lea.sflag [#allocation6], %s170
        %s172 = sand.u32 %s39, 1
        %s173 = smul.addr %s172, 8
        %s174 = scalar_lea.vmem [#allocation5], %s173
        %p175 = pneg %p52
        %p176 = pneg %p49
        %p177 = pneg %p73
        %p178 = pneg %p70
        %p179 = pneg %p99
        %p180 = pneg %p96
        %p181 = scmp.lt.s32.totalorder %s21, 1
        %s182 = scalar_select %p181, %s21, 1
        %s183 = smul.addr %s182, 8
        %s184 = scalar_lea.vmem %s2, %s183
        %p185 = scmp.lt.s32.totalorder %s21, 1
        %s186 = scalar_select %p185, %s21, 1
        %s187 = smul.addr %s186, 8
        %s188 = scalar_lea.vmem %s2, %s187
        %p189 = scmp.eq.s32.totalorder %s22, 0
        // Predicated region
        $region37: #{tpu_custom_call.1} parent=27 // pred_check
          %p190 = pneg %p189
        $region38: #{tpu_custom_call.1} parent=27 // pred_check_branch
          %192 = sbr.rel (%p190) target = $region40
        $region39: #{tpu_custom_call.1} parent=27 // pred_region
          %vm193 = vcmask 7168
          %194 = vst.msk [vmem:[#allocation2] sm:$0xff] %vm193, 0.0
          %195 = vst.msk [vmem:[#allocation3] sm:$0xff] %vm193, -inf
        $region40: #{tpu_custom_call.1} parent=27 // pred_fallthru
          _
        %p196 = scmp.lt.s32.totalorder %s22, 2
        // Predicated region
        $region41: #{tpu_custom_call.1} parent=27 // pred_check
          %p197 = pneg %p196
        $region42: #{tpu_custom_call.1} parent=27 // pred_check_branch
          %199 = sbr.rel (%p197) target = $region44
        $region43: #{tpu_custom_call.1} parent=27 // pred_region
          %v200 = vld [vmem:[%s160] sm:$0xff]
          %v201 = vld [vmem:[#allocation2] sm:$0xff]
          %202 = vadd.xlane.f32.xlu0 %v200
          %v203 = vpop.xlane.xlu0 %202
          %v204 = vadd.f32 %v201, %v203
          %vm205 = vcmask 7168
          %206 = vst.msk [vmem:[#allocation2] sm:$0xff] %vm205, %v204
          %v207 = vld [vmem:[#allocation3] sm:$0xff]
          %208 = vmax.xlane.f32.xlu0 %v200
          %v209 = vpop.xlane.xlu0 %208
          %v210 = vmax.f32 %v207, %v209
          %211 = vst.msk [vmem:[#allocation3] sm:$0xff] %vm205, %v210
        $region44: #{tpu_custom_call.1} parent=27 // pred_fallthru
          _
        %p212 = scmp.eq.s32.totalorder %s22, 2
        // Predicated region
        $region45: #{tpu_custom_call.1} parent=27 // pred_check
          %p213 = pneg %p212
        $region46: #{tpu_custom_call.1} parent=27 // pred_check_branch
          %215 = sbr.rel (%p213) target = $region48
        $region47: #{tpu_custom_call.1} parent=27 // pred_region
          %v216 = vld [vmem:[%s160] sm:$0xff]
          %v217 = vlaneseq
          %v218 = vand.u32 %v217, 127
          %vm219 = vcmp.lt.s32.totalorder %v218, 68
          %v220 = vsel %vm219, %v216, 0.0
          %v221 = vsel %vm219, %v216, -inf
          %v222 = vld [vmem:[#allocation2] sm:$0xff]
          %223 = vadd.xlane.f32.xlu0 %v220
          %v224 = vpop.xlane.xlu0 %223
          %v225 = vadd.f32 %v222, %v224
          %vm226 = vcmask 7168
          %227 = vst.msk [vmem:[#allocation2] sm:$0xff] %vm226, %v225
          %v228 = vld [vmem:[#allocation3] sm:$0xff]
          %229 = vmax.xlane.f32.xlu0 %v221
          %v230 = vpop.xlane.xlu0 %229
          %v231 = vmax.f32 %v228, %v230
          %232 = vst.msk [vmem:[#allocation3] sm:$0xff] %vm226, %v231
          %v233 = vld [vmem:[#allocation2] sm:$0xff]
          %v234 = vmul.f32 %v233, 0.0030864198
          %v235 = vld [vmem:[#allocation3] sm:$0xff]
          %v236 = vadd.f32 %v234, %v235
          %237 = vst.msk [vmem:[#allocation4] sm:$0xff] %vm226, 0.0
          %238 = vst.msk [vmem:[#allocation4 + $0x8] sm:$0xff] %vm226, 0.0
          %239 = vst.msk [vmem:[#allocation4 + $0x10] sm:$0xff] %vm226, 0.0
          %240 = vst.msk [vmem:[#allocation4 + $0x8] sm:$0xff] %vm226, %v236
          %s241 = sld [smem:[#allocation8]]
          %v242 = vld [vmem:[#allocation4 + $0x5] sm:$0xff]
          %v243 = vstv %s241
          %v244 = vmul.f32 %v243, %v242
          %s245 = sld [smem:[#allocation8 + $0x1]]
          %v246 = vld [vmem:[#allocation4 + $0x6] sm:$0xff]
          %v247 = vstv %s245
          %v248 = vmul.f32 %v247, %v246
          %v249 = vadd.f32 %v244, %v248
          %s250 = sld [smem:[#allocation8 + $0x2]]
          %v251 = vld [vmem:[#allocation4 + $0x7] sm:$0xff]
          %v252 = vstv %s250
          %v253 = vmul.f32 %v252, %v251
          %v254 = vadd.f32 %v249, %v253
          %s255 = sld [smem:[#allocation8 + $0x3]]
          %v256 = vld [vmem:[#allocation4 + $0x8] sm:$0xff]
          %v257 = vstv %s255
          %v258 = vmul.f32 %v257, %v256
          %v259 = vadd.f32 %v254, %v258
          %s260 = sld [smem:[#allocation8 + $0x4]]
          %v261 = vld [vmem:[#allocation4 + $0x9] sm:$0xff]
          %v262 = vstv %s260
          %v263 = vmul.f32 %v262, %v261
          %v264 = vadd.f32 %v259, %v263
          %s265 = sld [smem:[#allocation8 + $0x5]]
          %v266 = vld [vmem:[#allocation4 + $0xa] sm:$0xff]
          %v267 = vstv %s265
          %v268 = vmul.f32 %v267, %v266
          %v269 = vadd.f32 %v264, %v268
          %s270 = sld [smem:[#allocation8 + $0x6]]
          %v271 = vld [vmem:[#allocation4 + $0xb] sm:$0xff]
          %v272 = vstv %s270
          %v273 = vmul.f32 %v272, %v271
          %v274 = vadd.f32 %v269, %v273
          %v275 = vxor.u32 %v274, 2147483648
          %v276 = vmul.f32 %v275, 1.442695
          %v277 = vpow.pop %v276
          %v278 = vadd.f32 %v277, 1.0
          %v279 = vrcp.pop %v278
          %v280 = vmul.f32 1.0, %v279
          %281 = vst.msk [vmem:[%s188] sm:$0xff] %vm226, %v280
        $region48: #{tpu_custom_call.1} parent=27 // pred_fallthru
          _
        %p282 = scmp.lt.s32.totalorder %s21, 1
        %s283 = scalar_select %p282, %s21, 1
        %s284 = smul.addr %s283, 8
        %s285 = scalar_lea.vmem %s2, %s284
        // Predicated region
        $region49: #{tpu_custom_call.1} parent=27 // pred_check
          %p286 = pneg %p96
        $region50: #{tpu_custom_call.1} parent=27 // pred_check_branch
          %288 = sbr.rel (%p286) target = $region52
        $region51: #{tpu_custom_call.1} parent=27 // pred_region
          _
        $region52: #{tpu_custom_call.1} parent=27 // pred_fallthru
          _
      $region28: #{tpu_custom_call.1} parent=5 // pred_fallthru
        _
      %p289 = scmp.le.s32.totalorder 2, %s12
      // Predicated region
      $region53: #{tpu_custom_call.1} parent=5 // pred_check
        %p290 = pneg %p289
      $region54: #{tpu_custom_call.1} parent=5 // pred_check_branch
        %292 = sbr.rel (%p290) target = $region56
      $region55: #{tpu_custom_call.1} parent=5 // pred_region
        %s293 = ssub.s32 %s12, 2
        // Predicated region
        $region57: #{tpu_custom_call.1} parent=55 // pred_check
          %p294 = pneg %p102
        $region58: #{tpu_custom_call.1} parent=55 // pred_check_branch
          %296 = sbr.rel (%p294) target = $region60
        $region59: #{tpu_custom_call.1} parent=55 // pred_region
          %p297 = scmp.lt.s32.totalorder %s23, 1
          %s298 = scalar_select %p297, %s23, 1
          %s299 = smul.addr %s298, 8
          %s300 = scalar_lea.vmem %s2, %s299
        $region60: #{tpu_custom_call.1} parent=55 // pred_fallthru
          _
      $region56: #{tpu_custom_call.1} parent=5 // pred_fallthru
        _
    $region6: #{tpu_custom_call.1} parent=1 // loop_footer
      %s16 = sadd.s32 1, %s12
    $region7: #{tpu_custom_call.1} parent=1 // loop_footer_branch
      %11 = sbr.rel target = $region3
    $region8: #{tpu_custom_call.1} parent=1 // loop_exit
      _
    %301 = vsyncpa [#allocation6], 1
    %s302 = scalar_lea.sflag [#allocation6], 1
    %303 = vsyncpa %s302, 1
    %304 = vsyncpa [#allocation7], 1
    %s305 = scalar_lea.sflag [#allocation7], 1
    %306 = vsyncpa %s305, 1

</llo_original>
